<compile_context>
chip_gen: v6e
topology: v6e:2x2x1
jax: 0.10.0
libtpu: 0.0.40
codegen_flags: <defaults>
</compile_context>

<pallas_src>
import jax
import jax.numpy as jnp
from jax.experimental import pallas as pl
from jax.experimental.pallas import tpu as pltpu


# ----------------------------------------------------------------------------
# Pallas kernel: fused 1x1 conv + folded BN + ReLU on one (batch, tile) block.
# ----------------------------------------------------------------------------
def _conv1x1_bn_relu_kernel(x_ref, w_ref, b_ref, o_ref):
    # x_ref: (1, Cin, T)   T spatial pixels in the 128-lane minor dim
    # w_ref: (Cout, Cin)   BN-folded 1x1 conv weight
    # b_ref: (Cout, 1)     BN-folded shift (broadcast over lanes)
    # o_ref: (1, Cout, T)  lane-dense output tile
    y = jnp.dot(w_ref[...], x_ref[0], preferred_element_type=jnp.float32)
    y = jnp.maximum(y + b_ref[...], 0.0)          # bias + ReLU in one VPU pass
    o_ref[0] = y.astype(o_ref.dtype)


# ----------------------------------------------------------------------------
# Wrapper: PyTorch-style NCHW in/out, eval-mode BN fold, single pallas_call.
# ----------------------------------------------------------------------------
def conv1x1_bn_relu(x_nchw, weight, gamma, beta, running_mean, running_var,
                    eps=1e-5, compute_dtype=jnp.float32):
    """Forward of `Conv`: Conv2d(Cin, Cout, 1, 1, 0, bias=False) + BN + ReLU.

    x_nchw: (N, Cin, H, W)    weight: (Cout, Cin, 1, 1)
    BatchNorm is applied in eval mode with the provided running statistics.
    Pass compute_dtype=jnp.bfloat16 on v6e/v7x to halve HBM/vreg traffic;
    accumulation stays in float32 either way.
    """
    N, Cin, H, W = x_nchw.shape
    Cout = weight.shape[0]
    HW = H * W

    # Fold eval-mode BN into the (bias-free) conv.
    scale = gamma / jnp.sqrt(running_var + eps)
    w2 = (weight.reshape(Cout, Cin) * scale[:, None]).astype(compute_dtype)
    b2 = (beta - running_mean * scale).reshape(Cout, 1).astype(jnp.float32)

    # NCHW -> (N, Cin, H*W): free reshape, pixels land in the lane dimension.
    x3 = x_nchw.reshape(N, Cin, HW).astype(compute_dtype)

    # Spatial tiling: one whole-image lane-dense block per batch element at
    # small sizes; split into 2048-pixel tiles only for large images.
    if HW > 2048 and HW % 2048 == 0:
        tile = 2048
    else:
        tile = HW
    n_tiles = HW // tile

    out = pl.pallas_call(
        _conv1x1_bn_relu_kernel,
        out_shape=jax.ShapeDtypeStruct((N, Cout, HW), jnp.float32),
        grid=(N, n_tiles),
        in_specs=[
            pl.BlockSpec((1, Cin, tile), lambda n, t: (n, 0, t)),
            pl.BlockSpec((Cout, Cin), lambda n, t: (0, 0)),
            pl.BlockSpec((Cout, 1), lambda n, t: (0, 0)),
        ],
        out_specs=pl.BlockSpec((1, Cout, tile), lambda n, t: (n, 0, t)),
        compiler_params=pltpu.CompilerParams(
            dimension_semantics=("parallel", "parallel")),
    )(x3, w2, b2)

    return out.reshape(N, Cout, H, W)             # already NCHW, lane-dense


# ----------------------------------------------------------------------------
if __name__ == "__main__":
    key = jax.random.PRNGKey(0)
    N, Cin, Cout, H, W = 2, 4, 8, 16, 16
    kx, kw, kg, kb, km, kv = jax.random.split(key, 6)

    x = jax.random.normal(kx, (N, Cin, H, W), jnp.float32)
    bound = 1.0 / float(Cin) ** 0.5               # nn.Conv2d default init (k=1)
    weight = jax.random.uniform(kw, (Cout, Cin, 1, 1), jnp.float32,
                                -bound, bound)
    # TODO(synk): BatchNorm is implemented in eval mode (running statistics);
    # training-mode batch statistics / running-stat updates are not reproduced.
    gamma = jax.random.uniform(kg, (Cout,), jnp.float32, 0.5, 1.5)
    beta = 0.1 * jax.random.normal(kb, (Cout,), jnp.float32)
    running_mean = 0.1 * jax.random.normal(km, (Cout,), jnp.float32)
    running_var = jax.random.uniform(kv, (Cout,), jnp.float32, 0.5, 1.5)
    eps = 1e-5

    # Pure-JAX reference with identical eval-mode semantics.
    scale = gamma / jnp.sqrt(running_var + eps)
    ref = jnp.einsum("oi,nihw->nohw", weight.reshape(Cout, Cin), x)
    ref = ref * scale[None, :, None, None] \
        + (beta - running_mean * scale)[None, :, None, None]
    ref = jnp.maximum(ref, 0.0)

    fwd_f32 = jax.jit(lambda *a: conv1x1_bn_relu(*a))
    fwd_bf16 = jax.jit(lambda *a: conv1x1_bn_relu(
        *a, compute_dtype=jnp.bfloat16))

    out = jax.block_until_ready(
        fwd_f32(x, weight, gamma, beta, running_mean, running_var))
    assert out.shape == (N, Cout, H, W), out.shape
    assert bool(jnp.all(jnp.isfinite(out))) and bool(jnp.all(out >= 0.0))
    assert bool(jnp.allclose(out, ref, atol=1e-5, rtol=1e-5))

    # bf16 activation/weight path (v6e/v7x target), f32 accumulation.
    out_bf16 = jax.block_until_ready(
        fwd_bf16(x, weight, gamma, beta, running_mean, running_var))
    assert bool(jnp.allclose(out_bf16, ref, atol=5e-2, rtol=5e-2))

    print("KERNEL_OK")
</pallas_src>

<mosaic_0001>
module attributes {stable_mosaic.version = 11 : i64} {
  func.func @_conv1x1_bn_relu_kernel(%arg0: i32, %arg1: i32, %arg2: memref<1x4x256xf32, #tpu.memory_space<vmem>>, %arg3: memref<8x4xf32, #tpu.memory_space<vmem>>, %arg4: memref<8x1xf32, #tpu.memory_space<vmem>>, %arg5: memref<1x8x256xf32, #tpu.memory_space<vmem>>) attributes {dimension_semantics = [#tpu.dimension_semantics<parallel>, #tpu.dimension_semantics<parallel>], iteration_bounds = array<i64: 2, 1>, scalar_prefetch = 0 : i64, scratch_operands = 0 : i64, tpu.core_type = #tpu.core_type<tc>, window_params = [{transform_indices = @transform_0, window_bounds = array<i64: 1, 4, 256>}, {pipeline_mode = #tpu.pipeline_mode<synchronous>, transform_indices = @transform_1, window_bounds = array<i64: 8, 4>}, {pipeline_mode = #tpu.pipeline_mode<synchronous>, transform_indices = @transform_2, window_bounds = array<i64: 8, 1>}, {transform_indices = @transform_3, window_bounds = array<i64: 1, 8, 256>}]} {
    %c0 = arith.constant 0 : index
    %c0_0 = arith.constant 0 : index
    %0 = vector.load %arg3[%c0, %c0_0] : memref<8x4xf32, #tpu.memory_space<vmem>>, vector<8x4xf32>
    %c0_1 = arith.constant 0 : index
    %c0_2 = arith.constant 0 : index
    %c0_3 = arith.constant 0 : index
    %1 = vector.load %arg2[%c0_1, %c0_2, %c0_3] : memref<1x4x256xf32, #tpu.memory_space<vmem>>, vector<1x4x256xf32>
    %2 = vector.shape_cast %1 : vector<1x4x256xf32> to vector<4x256xf32>
    %cst = arith.constant dense<0.000000e+00> : vector<8x256xf32>
    %3 = tpu.matmul %0, %2, %cst {dimension_numbers = #tpu.dot_dimension_numbers<[1], [0], [0], [1], [0, 0, 1, 1], [], []>} : vector<8x4xf32>, vector<4x256xf32>, vector<8x256xf32> -> vector<8x256xf32>
    %c0_4 = arith.constant 0 : index
    %c0_5 = arith.constant 0 : index
    %4 = vector.load %arg4[%c0_4, %c0_5] : memref<8x1xf32, #tpu.memory_space<vmem>>, vector<8x1xf32>
    %5 = vector.broadcast %4 : vector<8x1xf32> to vector<8x256xf32>
    %6 = arith.addf %3, %5 : vector<8x256xf32>
    %cst_6 = arith.constant 0.000000e+00 : f32
    %7 = vector.broadcast %cst_6 : f32 to vector<8x256xf32>
    %8 = arith.maximumf %6, %7 : vector<8x256xf32>
    %c0_7 = arith.constant 0 : index
    %c0_8 = arith.constant 0 : index
    %c0_9 = arith.constant 0 : index
    %9 = vector.load %arg5[%c0_7, %c0_8, %c0_9] : memref<1x8x256xf32, #tpu.memory_space<vmem>>, vector<1x8x256xf32>
    %10 = vector.shape_cast %9 : vector<1x8x256xf32> to vector<8x256xf32>
    %11 = vector.shape_cast %8 : vector<8x256xf32> to vector<1x8x256xf32>
    tpu.vector_store %arg5[%c0_7, %c0_8, %c0_9], %11 {strides = array<i32>} : memref<1x8x256xf32, #tpu.memory_space<vmem>>, vector<1x8x256xf32>,
    return
  }
  func.func @transform_0(%arg0: i32, %arg1: i32) -> (i32, i32, i32) {
    %c0_i32 = arith.constant 0 : i32
    %c0_i32_0 = arith.constant 0 : i32
    return %arg0, %c0_i32, %arg1 : i32, i32, i32
  }
  func.func @transform_1(%arg0: i32, %arg1: i32) -> (i32, i32) {
    %c0_i32 = arith.constant 0 : i32
    %c0_i32_0 = arith.constant 0 : i32
    %c0_i32_1 = arith.constant 0 : i32
    return %c0_i32, %c0_i32_0 : i32, i32
  }
  func.func @transform_2(%arg0: i32, %arg1: i32) -> (i32, i32) {
    %c0_i32 = arith.constant 0 : i32
    %c0_i32_0 = arith.constant 0 : i32
    %c0_i32_1 = arith.constant 0 : i32
    return %c0_i32, %c0_i32_0 : i32, i32
  }
  func.func @transform_3(%arg0: i32, %arg1: i32) -> (i32, i32, i32) {
    %c0_i32 = arith.constant 0 : i32
    %c0_i32_0 = arith.constant 0 : i32
    return %arg0, %c0_i32, %arg1 : i32, i32, i32
  }
}

</mosaic_0001>

<llo_original>
// kernel: _lambda_.1
$region0: #{_lambda_.1}
  #allocation0 [shape = 'u32[]', space=smem, size = 0x4, offset = 0x4, fixed_abs, tag = 'smem constant byte address 0x4 - core index']
  #allocation1 [shape = 'u32[144,128]{1,0:T(1,128)}', space=vmem, size = 0x12000, scoped, tag = 'internal scratch']
  %s0 = inlined_call_operand.vmem [shape: f32[2,4,256], index: 0, kind: input, shape index: {}]
  %s1 = inlined_call_operand.vmem [shape: f32[8,4], index: 1, kind: input, shape index: {}]
  %s2 = inlined_call_operand.vmem [shape: f32[8,1], index: 2, kind: input, shape index: {}]
  %s3 = inlined_call_operand.vmem [shape: f32[2,8,256], index: 3, kind: output, shape index: {}]
  %s4 = sld [smem:[#allocation0]]
  $region45: #{_lambda_.1} parent=0
    _
  %s6 = ssub.s32 1, %s4
  %s7 = scalar_select 0, %s6, %s4
  loop: start=0, step=1, limit=4
  $region2: #{_lambda_.1} parent=0 // loop_pre_header
    _
  $region3: #{_lambda_.1} parent=0 // loop_header
    %s9 = sphi 0, %s13
    %p10 = scmp.ge.s32.totalorder %s9, 4
    %s16 = sphi 0, %s28
    %s17 = sphi 0, %s24
    %s18 = sphi 0, %s16
    %s19 = sphi 0, %s17
    %s20 = sphi 0, %s18
    %s21 = sphi 0, %s19
    %s33 = sphi 0, %s35
    %s36 = sphi 0, %s33
    %s37 = sphi 0, %s36
    %s53 = sphi 0, %s37
    %s57 = sphi 0, %s57
    %s59 = sphi 0, %s57
    %s60 = sphi 0, %s59
    %s74 = sphi 0, %s60
    %s78 = sphi 0, %s78
    %s80 = sphi 0, %s78
    %s81 = sphi 0, %s80
    %s95 = sphi 0, %s81
    %s103 = sphi 0, %s105
    %s106 = sphi 0, %s103
    %s107 = sphi 0, %s106
    %s123 = sphi 0, %s107
  $region4: #{_lambda_.1} parent=0 // loop_header_branch
    %12 = sbr.rel (%p10) target = $region8
  $region5: #{_lambda_.1} parent=0 // loop_body
    %s14 = ssub.s32 %s9, 1
    %s15 = ssub.s32 %s9, 2
    %s22 = sadd.s32 1, %s17
    %p23 = scmp.ge.s32.totalorder %s22, 1
    %s24 = scalar_select %p23, 0, %s22
    %s25 = sadd.s32 1, %s16
    %s26 = scalar_select %p23, %s25, %s16
    %p27 = scmp.ge.s32.totalorder %s26, 2
    %s28 = scalar_select %p27, 0, %s26
    %s29 = ssub.s32 %s16, %s28
    %s30 = ssub.s32 %s17, %s24
    %s31 = sor.u32 %s29, %s30
    %p32 = scmp.eq.s32.totalorder %s31, 0
    %s34 = sadd.s32 %s33, 1
    %s35 = scalar_select %p32, %s33, %s34
    %p38 = pneg %p32
    %p39 = scmp.eq.s32.totalorder %s9, 1
    %p40 = por %p38, %p39
    %p41 = scmp.ne.s32.totalorder %s33, %s36
    %p42 = scmp.eq.s32.totalorder %s9, 0
    %p43 = por %p41, %p42
    %p44 = scmp.ne.s32.totalorder %s33, %s36
    %p45 = scmp.eq.s32.totalorder %s14, 1
    %p46 = por %p44, %p45
    %p47 = scmp.ne.s32.totalorder %s36, %s37
    %p48 = scmp.eq.s32.totalorder %s14, 0
    %p49 = por %p47, %p48
    %p50 = scmp.ne.s32.totalorder %s36, %s37
    %p51 = scmp.eq.s32.totalorder %s15, 1
    %p52 = por %p50, %p51
    %p54 = scmp.ne.s32.totalorder %s37, %s53
    %p55 = scmp.eq.s32.totalorder %s15, 0
    %p56 = por %p54, %p55
    %s58 = sadd.s32 %s57, 1
    %p61 = scmp.eq.s32.totalorder %s9, 1
    %p62 = scmp.ne.s32.totalorder %s57, %s59
    %p63 = scmp.eq.s32.totalorder %s9, 0
    %p64 = por %p62, %p63
    %p65 = scmp.ne.s32.totalorder %s57, %s59
    %p66 = scmp.eq.s32.totalorder %s14, 1
    %p67 = por %p65, %p66
    %p68 = scmp.ne.s32.totalorder %s59, %s60
    %p69 = scmp.eq.s32.totalorder %s14, 0
    %p70 = por %p68, %p69
    %p71 = scmp.ne.s32.totalorder %s59, %s60
    %p72 = scmp.eq.s32.totalorder %s15, 1
    %p73 = por %p71, %p72
    %p75 = scmp.ne.s32.totalorder %s60, %s74
    %p76 = scmp.eq.s32.totalorder %s15, 0
    %p77 = por %p75, %p76
    %s79 = sadd.s32 %s78, 1
    %p82 = scmp.eq.s32.totalorder %s9, 1
    %p83 = scmp.ne.s32.totalorder %s78, %s80
    %p84 = scmp.eq.s32.totalorder %s9, 0
    %p85 = por %p83, %p84
    %p86 = scmp.ne.s32.totalorder %s78, %s80
    %p87 = scmp.eq.s32.totalorder %s14, 1
    %p88 = por %p86, %p87
    %p89 = scmp.ne.s32.totalorder %s80, %s81
    %p90 = scmp.eq.s32.totalorder %s14, 0
    %p91 = por %p89, %p90
    %p92 = scmp.ne.s32.totalorder %s80, %s81
    %p93 = scmp.eq.s32.totalorder %s15, 1
    %p94 = por %p92, %p93
    %p96 = scmp.ne.s32.totalorder %s81, %s95
    %p97 = scmp.eq.s32.totalorder %s15, 0
    %p98 = por %p96, %p97
    %s99 = ssub.s32 %s16, %s28
    %s100 = ssub.s32 %s17, %s24
    %s101 = sor.u32 %s99, %s100
    %p102 = scmp.eq.s32.totalorder %s101, 0
    %s104 = sadd.s32 %s103, 1
    %s105 = scalar_select %p102, %s103, %s104
    %p108 = pneg %p102
    %p109 = scmp.eq.s32.totalorder %s9, 1
    %p110 = por %p108, %p109
    %p111 = scmp.ne.s32.totalorder %s103, %s106
    %p112 = scmp.eq.s32.totalorder %s9, 0
    %p113 = por %p111, %p112
    %p114 = scmp.ne.s32.totalorder %s103, %s106
    %p115 = scmp.eq.s32.totalorder %s14, 1
    %p116 = por %p114, %p115
    %p117 = scmp.ne.s32.totalorder %s106, %s107
    %p118 = scmp.eq.s32.totalorder %s14, 0
    %p119 = por %p117, %p118
    %p120 = scmp.ne.s32.totalorder %s106, %s107
    %p121 = scmp.eq.s32.totalorder %s15, 1
    %p122 = por %p120, %p121
    %p124 = scmp.ne.s32.totalorder %s107, %s123
    %p125 = scmp.eq.s32.totalorder %s15, 0
    %p126 = por %p124, %p125
    %p127 = scmp.le.s32.totalorder 1, %s9
    %p128 = scmp.lt.s32.totalorder %s9, 3
    %p129 = pnand %p127, %p128
    %p130 = pneg %p129
    // Predicated region
    $region9: #{_lambda_.1} parent=5 // pred_check
      _
    $region10: #{_lambda_.1} parent=5 // pred_check_branch
      %132 = sbr.rel (%p129) target = $region12
    $region11: #{_lambda_.1} parent=5 // pred_region
      %s133 = ssub.s32 %s9, 1
      // Predicated region
      $region13: #{_lambda_.1} parent=11 // pred_check
        %p134 = pneg %p70
      $region14: #{_lambda_.1} parent=11 // pred_check_branch
        %136 = sbr.rel (%p134) target = $region16
      $region15: #{_lambda_.1} parent=11 // pred_region
        _
      $region16: #{_lambda_.1} parent=11 // pred_fallthru
        _
      // Predicated region
      $region17: #{_lambda_.1} parent=11 // pred_check
        %p137 = pneg %p91
      $region18: #{_lambda_.1} parent=11 // pred_check_branch
        %139 = sbr.rel (%p137) target = $region20
      $region19: #{_lambda_.1} parent=11 // pred_region
        _
      $region20: #{_lambda_.1} parent=11 // pred_fallthru
        _
    $region12: #{_lambda_.1} parent=5 // pred_fallthru
      _
    %p140 = scmp.lt.s32.totalorder %s9, 2
    // Predicated region
    $region21: #{_lambda_.1} parent=5 // pred_check
      %p141 = pneg %p140
    $region22: #{_lambda_.1} parent=5 // pred_check_branch
      %143 = sbr.rel (%p141) target = $region24
    $region23: #{_lambda_.1} parent=5 // pred_region
      // Predicated region
      $region25: #{_lambda_.1} parent=23 // pred_check
        %p144 = pneg %p43
      $region26: #{_lambda_.1} parent=23 // pred_check_branch
        %146 = sbr.rel (%p144) target = $region28
      $region27: #{_lambda_.1} parent=23 // pred_region
        %s147 = smul.u32 2, %s17
        %p148 = scmp.lt.s32.totalorder %s16, 1
        %s149 = scalar_select %p148, %s16, 1
        %p150 = scmp.lt.s32.totalorder %s147, 1
        %s151 = scalar_select %p150, %s147, 1
        %s152 = smul.addr %s149, 2
        %s153 = sadd.s32 %s151, %s152
        %s154 = smul.addr %s153, 4
        %s155 = scalar_lea.vmem %s0, %s154
        %s156 = smul.u32 2, %s17
      $region28: #{_lambda_.1} parent=23 // pred_fallthru
        _
    $region24: #{_lambda_.1} parent=5 // pred_fallthru
      _
    %p157 = scmp.le.s32.totalorder 1, %s9
    %p158 = scmp.lt.s32.totalorder %s9, 3
    %p159 = pnand %p157, %p158
    %p160 = pneg %p159
    // Predicated region
    $region29: #{_lambda_.1} parent=5 // pred_check
      _
    $region30: #{_lambda_.1} parent=5 // pred_check_branch
      %162 = sbr.rel (%p159) target = $region32
    $region31: #{_lambda_.1} parent=5 // pred_region
      %s163 = ssub.s32 %s9, 1
      %s164 = smul.u32 2, %s19
      %p165 = scmp.lt.s32.totalorder %s18, 1
      %s166 = scalar_select %p165, %s18, 1
      %p167 = scmp.lt.s32.totalorder %s164, 1
      %s168 = scalar_select %p167, %s164, 1
      %s169 = smul.addr %s166, 2
      %s170 = sadd.s32 %s168, %s169
      %s171 = smul.addr %s170, 4
      %s172 = scalar_lea.vmem %s0, %s171
      %p173 = pneg %p49
      %p174 = pneg %p46
      %p175 = pneg %p70
      %p176 = pneg %p67
      %p177 = pneg %p91
      %p178 = pneg %p88
      %p179 = pneg %p119
      %p180 = pneg %p116
      %s181 = smul.u32 2, %s19
      %p182 = scmp.lt.s32.totalorder %s18, 1
      %s183 = scalar_select %p182, %s18, 1
      %p184 = scmp.lt.s32.totalorder %s181, 1
      %s185 = scalar_select %p184, %s181, 1
      %s186 = smul.addr %s183, 2
      %s187 = sadd.s32 %s185, %s186
      %s188 = smul.addr %s187, 8
      %s189 = scalar_lea.vmem %s3, %s188
      %s190 = smul.u32 2, %s19
      %p191 = scmp.lt.s32.totalorder %s18, 1
      %s192 = scalar_select %p191, %s18, 1
      %p193 = scmp.lt.s32.totalorder %s190, 1
      %s194 = scalar_select %p193, %s190, 1
      %s195 = smul.addr %s192, 2
      %s196 = sadd.s32 %s194, %s195
      %s197 = smul.addr %s196, 4
      %s198 = scalar_lea.vmem %s0, %s197
      %s199 = smul.u32 2, %s19
      %s200 = smul.u32 2, %s19
      %p201 = scmp.lt.s32.totalorder %s18, 1
      %s202 = scalar_select %p201, %s18, 1
      %p203 = scmp.lt.s32.totalorder %s200, 1
      %s204 = scalar_select %p203, %s200, 1
      %s205 = smul.addr %s202, 2
      %s206 = sadd.s32 %s204, %s205
      %s207 = smul.addr %s206, 8
      %s208 = scalar_lea.vmem %s3, %s207
      %s209 = smul.u32 2, %s19
      %v210 = vld [vmem:[%s1] sm:$0xff]
      %v211 = vld [vmem:[%s198] sm:$0xff]
      %v212 = vld [vmem:[%s2] sm:$0xff]
      %214 = vset.pattern.permute.xlu0 0
      %215 = vperm.xlu0 %214, %v212
      %v216 = vpop.permute.xlu0 %215
      %v219 = vcombine.high %v211, %v211
      %vm220 = vcmask 31744
      %v222 = vsel %vm220, %v210, 0
      %vm224 = vcmask 1043456
      %v225 = vsel %vm224, %v211, 0
      %v227 = vsel %vm224, %v219, 0
      %229 = vmatprep.subr.mxu0 0.0
      %230 = vmatpush1.msra.mxu0 0.0
      %231 = vmatprep.subr.mxu0 0.0
      %232 = vmatpush1.msra.mxu0 0.0
      %233 = vmatprep.subr.mxu0 0.0
      %234 = vmatpush1.msra.mxu0 0.0
      %235 = vmatprep.subr.mxu0 0.0
      %236 = vmatpush1.msra.mxu0 0.0
      %237 = vmatprep.subr.mxu0 0.0
      %238 = vmatpush1.msra.mxu0 0.0
      %239 = vmatprep.subr.mxu0 0.0
      %240 = vmatpush1.msra.mxu0 0.0
      %241 = vmatprep.subr.mxu0 0.0
      %242 = vmatpush1.msra.mxu0 0.0
      %243 = vmatprep.subr.mxu0 0.0
      %244 = vmatpush1.msra.mxu0 0.0
      %245 = vmatprep.subr.mxu0 0.0
      %246 = vmatpush1.msra.mxu0 0.0
      %247 = vmatprep.subr.mxu0 0.0
      %248 = vmatpush1.msra.mxu0 0.0
      %249 = vmatprep.subr.mxu0 0.0
      %250 = vmatpush1.msra.mxu0 0.0
      %251 = vmatprep.subr.mxu0 0.0
      %252 = vmatpush1.msra.mxu0 0.0
      %253 = vmatprep.subr.mxu0 0.0
      %254 = vmatpush1.msra.mxu0 0.0
      %255 = vmatprep.subr.mxu0 0.0
      %256 = vmatpush1.msra.mxu0 0.0
      %257 = vmatprep.subr.mxu0 0.0
      %258 = vmatpush1.msra.mxu0 0.0
      %259 = vmatprep.subr.mxu0 %v227
      %260 = vmatpush1.msra.mxu0 %v225
      %261 = vmatprep.subr.mxu0 0.0
      %262 = vmatpush2.msra.mxu0 0.0
      %263 = vmatprep.subr.mxu0 0.0
      %264 = vmatpush2.msra.mxu0 0.0
      %265 = vmatprep.subr.mxu0 0.0
      %266 = vmatpush2.msra.mxu0 0.0
      %267 = vmatprep.subr.mxu0 0.0
      %268 = vmatpush2.msra.mxu0 0.0
      %269 = vmatprep.subr.mxu0 0.0
      %270 = vmatpush2.msra.mxu0 0.0
      %271 = vmatprep.subr.mxu0 0.0
      %272 = vmatpush2.msra.mxu0 0.0
      %273 = vmatprep.subr.mxu0 0.0
      %274 = vmatpush2.msra.mxu0 0.0
      %275 = vmatprep.subr.mxu0 0.0
      %276 = vmatpush2.msra.mxu0 0.0
      %277 = vmatprep.subr.mxu0 0.0
      %278 = vmatpush2.msra.mxu0 0.0
      %279 = vmatprep.subr.mxu0 0.0
      %280 = vmatpush2.msra.mxu0 0.0
      %281 = vmatprep.subr.mxu0 0.0
      %282 = vmatpush2.msra.mxu0 0.0
      %283 = vmatprep.subr.mxu0 0.0
      %284 = vmatpush2.msra.mxu0 0.0
      %285 = vmatprep.subr.mxu0 0.0
      %286 = vmatpush2.msra.mxu0 0.0
      %287 = vmatprep.subr.mxu0 0.0
      %288 = vmatpush2.msra.mxu0 0.0
      %289 = vmatprep.subr.mxu0 0.0
      %290 = vmatpush2.msra.mxu0 0.0
      %291 = vmatprep.subr.mxu0 0.0
      %292 = vmatpush2.msra.mxu0 0.0
      %293 = vmatprep.mubr.f32.mxu0 0.0
      %294 = vmatmul.mubr.f32.gmra.mxu0 %v222
      %v295 = vpop.f32.mrf.mxu0
      %v296 = vadd.f32 %v216, %v295
      %v297 = vpop.f32.mrf.mxu0
      %v298 = vadd.f32 %v216, %v297
      %299 = vdwg.mxu0
      %v300 = vmax.f32 %v296, 0.0
      %v301 = vmax.f32 %v298, 0.0
      %302 = vst [vmem:[%s208] sm:$0xff] %v300
      %303 = vst [vmem:[%s208 + $0x8] sm:$0xff] %v301
      %s304 = smul.u32 2, %s19
      %p305 = scmp.lt.s32.totalorder %s18, 1
      %s306 = scalar_select %p305, %s18, 1
      %p307 = scmp.lt.s32.totalorder %s304, 1
      %s308 = scalar_select %p307, %s304, 1
      %s309 = smul.addr %s306, 2
      %s310 = sadd.s32 %s308, %s309
      %s311 = smul.addr %s310, 8
      %s312 = scalar_lea.vmem %s3, %s311
      // Predicated region
      $region33: #{_lambda_.1} parent=31 // pred_check
        %p313 = pneg %p116
      $region34: #{_lambda_.1} parent=31 // pred_check_branch
        %315 = sbr.rel (%p313) target = $region36
      $region35: #{_lambda_.1} parent=31 // pred_region
        %s316 = smul.u32 2, %s19
      $region36: #{_lambda_.1} parent=31 // pred_fallthru
        _
    $region32: #{_lambda_.1} parent=5 // pred_fallthru
      _
    %p317 = scmp.le.s32.totalorder 2, %s9
    // Predicated region
    $region37: #{_lambda_.1} parent=5 // pred_check
      %p318 = pneg %p317
    $region38: #{_lambda_.1} parent=5 // pred_check_branch
      %320 = sbr.rel (%p318) target = $region40
    $region39: #{_lambda_.1} parent=5 // pred_region
      %s321 = ssub.s32 %s9, 2
      // Predicated region
      $region41: #{_lambda_.1} parent=39 // pred_check
        %p322 = pneg %p122
      $region42: #{_lambda_.1} parent=39 // pred_check_branch
        %324 = sbr.rel (%p322) target = $region44
      $region43: #{_lambda_.1} parent=39 // pred_region
        %s325 = smul.u32 2, %s21
        %p326 = scmp.lt.s32.totalorder %s20, 1
        %s327 = scalar_select %p326, %s20, 1
        %p328 = scmp.lt.s32.totalorder %s325, 1
        %s329 = scalar_select %p328, %s325, 1
        %s330 = smul.addr %s327, 2
        %s331 = sadd.s32 %s329, %s330
        %s332 = smul.addr %s331, 8
        %s333 = scalar_lea.vmem %s3, %s332
      $region44: #{_lambda_.1} parent=39 // pred_fallthru
        _
    $region40: #{_lambda_.1} parent=5 // pred_fallthru
      _
  $region6: #{_lambda_.1} parent=0 // loop_footer
    %s13 = sadd.s32 1, %s9
  $region7: #{_lambda_.1} parent=0 // loop_footer_branch
    %8 = sbr.rel target = $region3
  $region8: #{_lambda_.1} parent=0 // loop_exit
    _

</llo_original>
